<compile_context>
chip_gen: v7x
topology: tpu7x:2x2x1
jax: 0.10.0
libtpu: 0.0.40
codegen_flags: <defaults>
</compile_context>

<pallas_src>
import functools

import jax
import jax.numpy as jnp
from jax.experimental import pallas as pl
from jax.experimental.pallas import tpu as pltpu


def _gaussian_aug_kernel(*refs, n, c, k, apply_noise):
    if apply_noise:
        w_ref, b_ref, inv_std_ref, x_ref, z_ref, lab_ref, out_ref, loss_ref = refs
    else:
        w_ref, b_ref, x_ref, lab_ref, out_ref, loss_ref = refs
        inv_std_ref = z_ref = None

    x = x_ref[...].astype(jnp.float32)                      # (n*c, T)  pixels on lanes
    if apply_noise:
        # inputs + sigma * randn / std  ==  x + z * (sigma/std)
        x = x + z_ref[...].astype(jnp.float32) * inv_std_ref[...]

    w = w_ref[...].astype(jnp.float32)                      # (k, c)
    b = b_ref[...].astype(jnp.float32)                      # (k, 1)
    t = x.shape[-1]

    cls = jax.lax.broadcasted_iota(jnp.int32, (k, t), 0)
    block_loss = jnp.float32(0.0)

    for ni in range(n):                                     # n, c, k are tiny -> python unroll
        x_n = x[ni * c:(ni + 1) * c, :]                     # (c, T)
        # "model": 1x1-conv head as VPU broadcast FMAs (lane-dense; MXU would waste a pass)
        logits_n = b                                        # (k, 1) -> broadcasts to (k, T)
        for ci in range(c):
            logits_n = logits_n + w[:, ci:ci + 1] * x_n[ci:ci + 1, :]
        out_ref[ni * k:(ni + 1) * k, :] = logits_n.astype(out_ref.dtype)

        # "loss": pixel-wise cross entropy (summed here, mean taken in wrapper)
        m = jnp.max(logits_n, axis=0, keepdims=True)                              # (1, T)
        lse = m + jnp.log(jnp.sum(jnp.exp(logits_n - m), axis=0, keepdims=True))  # (1, T)
        lab = lab_ref[ni:ni + 1, :]                                               # (1, T) int32
        correct = jnp.sum(jnp.where(cls == lab, logits_n, 0.0),
                          axis=0, keepdims=True)                                  # (1, T)
        block_loss = block_loss + jnp.sum(lse - correct)

    # per-block partial loss written into a fully tiled (8, 128) block; wrapper sums them.
    row_i = jax.lax.broadcasted_iota(jnp.int32, (8, 128), 0)
    col_i = jax.lax.broadcasted_iota(jnp.int32, (8, 128), 1)
    loss_ref[...] = jnp.where((row_i == 0) & (col_i == 0), block_loss, 0.0)


def _pick_tile(hw, target_lanes):
    """Largest multiple-of-128 divisor of hw that is <= target_lanes (fallback: full hw)."""
    if hw <= 128:
        return hw
    best = hw
    cap = min(hw, max(128, int(target_lanes)))
    t = 128
    while t <= cap:
        if hw % t == 0:
            best = t
        t += 128
    return best


def gaussian_aug_model(x_nchw, labels, std_c, w_kc, b_k, *, sigma, key, tile_lanes=16384):
    """Returns (loss[1], outputs[N,K,H,W]) — mirrors (torch.unsqueeze(loss, 0), outputs)."""
    N, C, H, W = x_nchw.shape
    K = int(b_k.shape[0])
    HW = H * W
    P = N * HW

    tile = _pick_tile(HW, tile_lanes)
    grid = HW // tile
    apply_noise = float(sigma) > 0.0

    # Free reshapes only (no transposes): NCHW stays NCHW.
    x2d = x_nchw.reshape(N * C, HW).astype(jnp.float32)
    lab2d = labels.reshape(N, HW).astype(jnp.int32)
    w = w_kc.reshape(K, C).astype(jnp.float32)
    b_col = b_k.reshape(K, 1).astype(jnp.float32)

    in_specs = [
        pl.BlockSpec((K, C), lambda i: (0, 0)),            # w  (whole, constant across grid)
        pl.BlockSpec((K, 1), lambda i: (0, 0)),            # b
    ]
    args = [w, b_col]

    if apply_noise:
        inv_std = jnp.broadcast_to(
            (jnp.float32(sigma) / std_c.reshape(1, C).astype(jnp.float32)), (N, C)
        ).reshape(N * C, 1)
        z2d = jax.random.normal(key, (N * C, HW), dtype=jnp.float32)
        in_specs.append(pl.BlockSpec((N * C, 1), lambda i: (0, 0)))   # inv_std
        args.append(inv_std)

    in_specs.append(pl.BlockSpec((N * C, tile), lambda i: (0, i)))    # x tile
    args.append(x2d)
    if apply_noise:
        in_specs.append(pl.BlockSpec((N * C, tile), lambda i: (0, i)))  # z tile
        args.append(z2d)
    in_specs.append(pl.BlockSpec((N, tile), lambda i: (0, i)))        # labels tile
    args.append(lab2d)

    out_shape = (
        jax.ShapeDtypeStruct((N * K, HW), jnp.float32),               # logits, lane-dense
        jax.ShapeDtypeStruct((grid * 8, 128), jnp.float32),           # per-block partial loss
    )
    out_specs = (
        pl.BlockSpec((N * K, tile), lambda i: (0, i)),
        pl.BlockSpec((8, 128), lambda i: (i, 0)),
    )

    # TPU-only compiler params (skipped when interpreting / not on TPU).
    compiler_params = None
    if jax.default_backend() == "tpu":
        compiler_params = pltpu.CompilerParams(
            dimension_semantics=("parallel",),      # independent pixel blocks -> megacore OK
            vmem_limit_bytes=32 * 1024 * 1024,      # safe on v5e/v6e/v7x; blocks are a few MB
        )

    noise_flops = 2 * C * P if apply_noise else 0
    cost_estimate = pl.CostEstimate(
        flops=int(noise_flops + 2 * C * K * P + 4 * K * P),
        transcendentals=int((K + 1) * P),
        bytes_accessed=int(4 * N * C * HW * (2 if apply_noise else 1)   # x (+ z)
                           + 4 * N * HW                                  # labels
                           + 4 * N * K * HW                              # logits
                           + 4 * grid * 8 * 128),                        # loss partials
    )

    kernel = functools.partial(_gaussian_aug_kernel, n=N, c=C, k=K, apply_noise=apply_noise)

    logits2d, loss_parts = pl.pallas_call(
        kernel,
        grid=(grid,),
        in_specs=in_specs,
        out_specs=out_specs,
        out_shape=out_shape,
        compiler_params=compiler_params,
        cost_estimate=cost_estimate,
    )(*args)

    loss = (jnp.sum(loss_parts) / jnp.float32(P)).reshape(1)
    outputs = logits2d.reshape(N, K, H, W)
    return loss, outputs


def _reference(x_nchw, labels, std_c, w_kc, b_k, *, sigma, key):
    """Pure-JAX reference using the exact same noise stream as the kernel wrapper."""
    N, C, H, W = x_nchw.shape
    K = int(b_k.shape[0])
    xf = x_nchw.astype(jnp.float32)
    if float(sigma) > 0.0:
        z = jax.random.normal(key, (N * C, H * W), dtype=jnp.float32).reshape(N, C, H, W)
        xf = xf + jnp.float32(sigma) * z / std_c.reshape(1, C, 1, 1).astype(jnp.float32)
    logits = jnp.einsum("kc,nchw->nkhw", w_kc.astype(jnp.float32), xf) \
        + b_k.reshape(1, K, 1, 1).astype(jnp.float32)
    flat = jnp.moveaxis(logits, 1, -1).reshape(-1, K)
    lab = labels.reshape(-1).astype(jnp.int32)
    lse = jax.nn.logsumexp(flat, axis=-1)
    correct = jnp.take_along_axis(flat, lab[:, None], axis=-1)[:, 0]
    loss = jnp.mean(lse - correct)
    return loss, logits


if __name__ == "__main__":
    # Small shapes consistent with the module: std param (1,3,1,1) forces C=3.
    N, C, H, W, K = 2, 3, 16, 16, 8
    sigma = 0.1                                                  # exercise the augmentation path
    std = jnp.array([0.229, 0.224, 0.225], dtype=jnp.float32)    # per-channel std

    key = jax.random.PRNGKey(0)
    kx, kl, kw, kb, kn = jax.random.split(key, 5)
    x = jax.random.normal(kx, (N, C, H, W), dtype=jnp.float32)
    labels = jax.random.randint(kl, (N, H, W), 0, K, dtype=jnp.int32)
    w = 0.1 * jax.random.normal(kw, (K, C), dtype=jnp.float32)   # 1x1-conv weight (K, C)
    b = 0.01 * jax.random.normal(kb, (K,), dtype=jnp.float32)    # bias (K,)

    # tile_lanes=128 on this toy input forces grid=2 so the tiled/partial-loss path is exercised.
    loss, outputs = gaussian_aug_model(x, labels, std, w, b, sigma=sigma, key=kn, tile_lanes=128)
    jax.block_until_ready((loss, outputs))

    assert loss.shape == (1,)
    assert outputs.shape == (N, K, H, W)

    ref_loss, ref_outputs = _reference(x, labels, std, w, b, sigma=sigma, key=kn)
    jax.block_until_ready((ref_loss, ref_outputs))
    assert bool(jnp.allclose(outputs, ref_outputs, rtol=1e-3, atol=1e-3)), "logits mismatch"
    assert bool(jnp.allclose(loss[0], ref_loss, rtol=1e-3, atol=1e-3)), "loss mismatch"

    print("KERNEL_OK")
</pallas_src>

<mosaic_0001>
module attributes {stable_mosaic.version = 11 : i64} {
  func.func @_gaussian_aug_kernel(%arg0: i32, %arg1: memref<8x3xf32, #tpu.memory_space<vmem>>, %arg2: memref<8x1xf32, #tpu.memory_space<vmem>>, %arg3: memref<6x1xf32, #tpu.memory_space<vmem>>, %arg4: memref<6x128xf32, #tpu.memory_space<vmem>>, %arg5: memref<6x128xf32, #tpu.memory_space<vmem>>, %arg6: memref<2x128xi32, #tpu.memory_space<vmem>>, %arg7: memref<16x128xf32, #tpu.memory_space<vmem>>, %arg8: memref<8x128xf32, #tpu.memory_space<vmem>>) attributes {dimension_semantics = [#tpu.dimension_semantics<arbitrary>], iteration_bounds = array<i64: 2>, scalar_prefetch = 0 : i64, scratch_operands = 0 : i64, tpu.core_type = #tpu.core_type<tc>, window_params = [{pipeline_mode = #tpu.pipeline_mode<synchronous>, transform_indices = @transform_0, window_bounds = array<i64: 8, 3>}, {pipeline_mode = #tpu.pipeline_mode<synchronous>, transform_indices = @transform_1, window_bounds = array<i64: 8, 1>}, {pipeline_mode = #tpu.pipeline_mode<synchronous>, transform_indices = @transform_2, window_bounds = array<i64: 6, 1>}, {transform_indices = @transform_3, window_bounds = array<i64: 6, 128>}, {transform_indices = @transform_4, window_bounds = array<i64: 6, 128>}, {transform_indices = @transform_5, window_bounds = array<i64: 2, 128>}, {transform_indices = @transform_6, window_bounds = array<i64: 16, 128>}, {transform_indices = @transform_7, window_bounds = array<i64: 8, 128>}]} {
    %c0 = arith.constant 0 : index
    %c0_0 = arith.constant 0 : index
    %0 = vector.load %arg4[%c0, %c0_0] : memref<6x128xf32, #tpu.memory_space<vmem>>, vector<6x128xf32>
    %c0_1 = arith.constant 0 : index
    %c0_2 = arith.constant 0 : index
    %1 = vector.load %arg5[%c0_1, %c0_2] : memref<6x128xf32, #tpu.memory_space<vmem>>, vector<6x128xf32>
    %c0_3 = arith.constant 0 : index
    %c0_4 = arith.constant 0 : index
    %2 = vector.load %arg3[%c0_3, %c0_4] : memref<6x1xf32, #tpu.memory_space<vmem>>, vector<6x1xf32>
    %3 = vector.broadcast %2 : vector<6x1xf32> to vector<6x128xf32>
    %4 = arith.mulf %1, %3 : vector<6x128xf32>
    %5 = arith.addf %0, %4 : vector<6x128xf32>
    %c0_5 = arith.constant 0 : index
    %c0_6 = arith.constant 0 : index
    %6 = vector.load %arg1[%c0_5, %c0_6] : memref<8x3xf32, #tpu.memory_space<vmem>>, vector<8x3xf32>
    %c0_7 = arith.constant 0 : index
    %c0_8 = arith.constant 0 : index
    %7 = vector.load %arg2[%c0_7, %c0_8] : memref<8x1xf32, #tpu.memory_space<vmem>>, vector<8x1xf32>
    %8 = tpu.iota {dimensions = array<i32: 0>} : vector<8x128xi32>
    %9 = vector.extract_strided_slice %5 {offsets = [0, 0], sizes = [3, 128], strides = [1, 1]} : vector<6x128xf32> to vector<3x128xf32>
    %10 = vector.extract_strided_slice %6 {offsets = [0, 0], sizes = [8, 1], strides = [1, 1]} : vector<8x3xf32> to vector<8x1xf32>
    %11 = vector.extract_strided_slice %9 {offsets = [0, 0], sizes = [1, 128], strides = [1, 1]} : vector<3x128xf32> to vector<1x128xf32>
    %12 = vector.broadcast %10 : vector<8x1xf32> to vector<8x128xf32>
    %13 = vector.broadcast %11 : vector<1x128xf32> to vector<8x128xf32>
    %14 = arith.mulf %12, %13 : vector<8x128xf32>
    %15 = vector.broadcast %7 : vector<8x1xf32> to vector<8x128xf32>
    %16 = arith.addf %15, %14 : vector<8x128xf32>
    %17 = vector.extract_strided_slice %6 {offsets = [0, 1], sizes = [8, 1], strides = [1, 1]} : vector<8x3xf32> to vector<8x1xf32>
    %18 = vector.extract_strided_slice %9 {offsets = [1, 0], sizes = [1, 128], strides = [1, 1]} : vector<3x128xf32> to vector<1x128xf32>
    %19 = vector.broadcast %17 : vector<8x1xf32> to vector<8x128xf32>
    %20 = vector.broadcast %18 : vector<1x128xf32> to vector<8x128xf32>
    %21 = arith.mulf %19, %20 : vector<8x128xf32>
    %22 = arith.addf %16, %21 : vector<8x128xf32>
    %23 = vector.extract_strided_slice %6 {offsets = [0, 2], sizes = [8, 1], strides = [1, 1]} : vector<8x3xf32> to vector<8x1xf32>
    %24 = vector.extract_strided_slice %9 {offsets = [2, 0], sizes = [1, 128], strides = [1, 1]} : vector<3x128xf32> to vector<1x128xf32>
    %25 = vector.broadcast %23 : vector<8x1xf32> to vector<8x128xf32>
    %26 = vector.broadcast %24 : vector<1x128xf32> to vector<8x128xf32>
    %27 = arith.mulf %25, %26 : vector<8x128xf32>
    %28 = arith.addf %22, %27 : vector<8x128xf32>
    %c0_9 = arith.constant 0 : index
    %c0_10 = arith.constant 0 : index
    %29 = vector.load %arg7[%c0_9, %c0_10] : memref<16x128xf32, #tpu.memory_space<vmem>>, vector<8x128xf32>
    tpu.vector_store %arg7[%c0_9, %c0_10], %28 {strides = array<i32>} : memref<16x128xf32, #tpu.memory_space<vmem>>, vector<8x128xf32>,
    %cst = arith.constant dense<0xFF800000> : vector<128xf32>
    %30 = vector.multi_reduction <maximumf>, %28, %cst [0] : vector<8x128xf32> to vector<128xf32>
    %31 = vector.shape_cast %30 : vector<128xf32> to vector<1x128xf32>
    %32 = vector.broadcast %31 : vector<1x128xf32> to vector<8x128xf32>
    %33 = arith.subf %28, %32 : vector<8x128xf32>
    %34 = math.exp %33 : vector<8x128xf32>
    %cst_11 = arith.constant dense<0.000000e+00> : vector<128xf32>
    %35 = vector.multi_reduction <add>, %34, %cst_11 [0] : vector<8x128xf32> to vector<128xf32>
    %36 = vector.shape_cast %35 : vector<128xf32> to vector<1x128xf32>
    %37 = math.log %36 : vector<1x128xf32>
    %38 = arith.addf %31, %37 : vector<1x128xf32>
    %c0_12 = arith.constant 0 : index
    %c0_13 = arith.constant 0 : index
    %39 = vector.load %arg6[%c0_12, %c0_13] : memref<2x128xi32, #tpu.memory_space<vmem>>, vector<1x128xi32>
    %40 = vector.broadcast %39 : vector<1x128xi32> to vector<8x128xi32>
    %41 = arith.cmpi eq, %8, %40 : vector<8x128xi32>
    %cst_14 = arith.constant 0.000000e+00 : f32
    %42 = vector.broadcast %cst_14 : f32 to vector<8x128xf32>
    %43 = arith.select %41, %28, %42 : vector<8x128xi1>, vector<8x128xf32>
    %cst_15 = arith.constant dense<0.000000e+00> : vector<128xf32>
    %44 = vector.multi_reduction <add>, %43, %cst_15 [0] : vector<8x128xf32> to vector<128xf32>
    %45 = vector.shape_cast %44 : vector<128xf32> to vector<1x128xf32>
    %46 = arith.subf %38, %45 : vector<1x128xf32>
    %47 = vector.shape_cast %46 : vector<1x128xf32> to vector<1x1x128xf32>
    %cst_16 = arith.constant dense<0.000000e+00> : vector<1xf32>
    %48 = vector.multi_reduction <add>, %47, %cst_16 [1, 2] : vector<1x1x128xf32> to vector<1xf32>
    %49 = vector.shape_cast %48 : vector<1xf32> to vector<1x1x1xf32>
    %50 = vector.extract %49[0, 0, 0] : f32 from vector<1x1x1xf32>
    %cst_17 = arith.constant 0.000000e+00 : f32
    %51 = arith.addf %cst_17, %50 : f32
    %52 = vector.extract_strided_slice %5 {offsets = [3, 0], sizes = [3, 128], strides = [1, 1]} : vector<6x128xf32> to vector<3x128xf32>
    %53 = vector.extract_strided_slice %6 {offsets = [0, 0], sizes = [8, 1], strides = [1, 1]} : vector<8x3xf32> to vector<8x1xf32>
    %54 = vector.extract_strided_slice %52 {offsets = [0, 0], sizes = [1, 128], strides = [1, 1]} : vector<3x128xf32> to vector<1x128xf32>
    %55 = vector.broadcast %53 : vector<8x1xf32> to vector<8x128xf32>
    %56 = vector.broadcast %54 : vector<1x128xf32> to vector<8x128xf32>
    %57 = arith.mulf %55, %56 : vector<8x128xf32>
    %58 = vector.broadcast %7 : vector<8x1xf32> to vector<8x128xf32>
    %59 = arith.addf %58, %57 : vector<8x128xf32>
    %60 = vector.extract_strided_slice %6 {offsets = [0, 1], sizes = [8, 1], strides = [1, 1]} : vector<8x3xf32> to vector<8x1xf32>
    %61 = vector.extract_strided_slice %52 {offsets = [1, 0], sizes = [1, 128], strides = [1, 1]} : vector<3x128xf32> to vector<1x128xf32>
    %62 = vector.broadcast %60 : vector<8x1xf32> to vector<8x128xf32>
    %63 = vector.broadcast %61 : vector<1x128xf32> to vector<8x128xf32>
    %64 = arith.mulf %62, %63 : vector<8x128xf32>
    %65 = arith.addf %59, %64 : vector<8x128xf32>
    %66 = vector.extract_strided_slice %6 {offsets = [0, 2], sizes = [8, 1], strides = [1, 1]} : vector<8x3xf32> to vector<8x1xf32>
    %67 = vector.extract_strided_slice %52 {offsets = [2, 0], sizes = [1, 128], strides = [1, 1]} : vector<3x128xf32> to vector<1x128xf32>
    %68 = vector.broadcast %66 : vector<8x1xf32> to vector<8x128xf32>
    %69 = vector.broadcast %67 : vector<1x128xf32> to vector<8x128xf32>
    %70 = arith.mulf %68, %69 : vector<8x128xf32>
    %71 = arith.addf %65, %70 : vector<8x128xf32>
    %c8 = arith.constant 8 : index
    %c0_18 = arith.constant 0 : index
    %72 = vector.load %arg7[%c8, %c0_18] : memref<16x128xf32, #tpu.memory_space<vmem>>, vector<8x128xf32>
    tpu.vector_store %arg7[%c8, %c0_18], %71 {strides = array<i32>} : memref<16x128xf32, #tpu.memory_space<vmem>>, vector<8x128xf32>,
    %cst_19 = arith.constant dense<0xFF800000> : vector<128xf32>
    %73 = vector.multi_reduction <maximumf>, %71, %cst_19 [0] : vector<8x128xf32> to vector<128xf32>
    %74 = vector.shape_cast %73 : vector<128xf32> to vector<1x128xf32>
    %75 = vector.broadcast %74 : vector<1x128xf32> to vector<8x128xf32>
    %76 = arith.subf %71, %75 : vector<8x128xf32>
    %77 = math.exp %76 : vector<8x128xf32>
    %cst_20 = arith.constant dense<0.000000e+00> : vector<128xf32>
    %78 = vector.multi_reduction <add>, %77, %cst_20 [0] : vector<8x128xf32> to vector<128xf32>
    %79 = vector.shape_cast %78 : vector<128xf32> to vector<1x128xf32>
    %80 = math.log %79 : vector<1x128xf32>
    %81 = arith.addf %74, %80 : vector<1x128xf32>
    %c1 = arith.constant 1 : index
    %c0_21 = arith.constant 0 : index
    %82 = vector.load %arg6[%c1, %c0_21] : memref<2x128xi32, #tpu.memory_space<vmem>>, vector<1x128xi32>
    %83 = vector.broadcast %82 : vector<1x128xi32> to vector<8x128xi32>
    %84 = arith.cmpi eq, %8, %83 : vector<8x128xi32>
    %cst_22 = arith.constant 0.000000e+00 : f32
    %85 = vector.broadcast %cst_22 : f32 to vector<8x128xf32>
    %86 = arith.select %84, %71, %85 : vector<8x128xi1>, vector<8x128xf32>
    %cst_23 = arith.constant dense<0.000000e+00> : vector<128xf32>
    %87 = vector.multi_reduction <add>, %86, %cst_23 [0] : vector<8x128xf32> to vector<128xf32>
    %88 = vector.shape_cast %87 : vector<128xf32> to vector<1x128xf32>
    %89 = arith.subf %81, %88 : vector<1x128xf32>
    %90 = vector.shape_cast %89 : vector<1x128xf32> to vector<1x1x128xf32>
    %cst_24 = arith.constant dense<0.000000e+00> : vector<1xf32>
    %91 = vector.multi_reduction <add>, %90, %cst_24 [1, 2] : vector<1x1x128xf32> to vector<1xf32>
    %92 = vector.shape_cast %91 : vector<1xf32> to vector<1x1x1xf32>
    %93 = vector.extract %92[0, 0, 0] : f32 from vector<1x1x1xf32>
    %94 = arith.addf %51, %93 : f32
    %95 = tpu.iota {dimensions = array<i32: 0>} : vector<8x128xi32>
    %96 = tpu.iota {dimensions = array<i32: 1>} : vector<8x128xi32>
    %c0_i32 = arith.constant 0 : i32
    %97 = vector.broadcast %c0_i32 : i32 to vector<8x128xi32>
    %98 = arith.cmpi eq, %95, %97 : vector<8x128xi32>
    %c0_i32_25 = arith.constant 0 : i32
    %99 = vector.broadcast %c0_i32_25 : i32 to vector<8x128xi32>
    %100 = arith.cmpi eq, %96, %99 : vector<8x128xi32>
    %101 = arith.andi %98, %100 : vector<8x128xi1>
    %cst_26 = arith.constant 0.000000e+00 : f32
    %102 = vector.broadcast %94 : f32 to vector<8x128xf32>
    %103 = vector.broadcast %cst_26 : f32 to vector<8x128xf32>
    %104 = arith.select %101, %102, %103 : vector<8x128xi1>, vector<8x128xf32>
    %c0_27 = arith.constant 0 : index
    %c0_28 = arith.constant 0 : index
    %105 = vector.load %arg8[%c0_27, %c0_28] : memref<8x128xf32, #tpu.memory_space<vmem>>, vector<8x128xf32>
    tpu.vector_store %arg8[%c0_27, %c0_28], %104 {strides = array<i32>} : memref<8x128xf32, #tpu.memory_space<vmem>>, vector<8x128xf32>,
    return
  }
  func.func @transform_0(%arg0: i32) -> (i32, i32) {
    %c0_i32 = arith.constant 0 : i32
    %c0_i32_0 = arith.constant 0 : i32
    %c0_i32_1 = arith.constant 0 : i32
    return %c0_i32, %c0_i32_0 : i32, i32
  }
  func.func @transform_1(%arg0: i32) -> (i32, i32) {
    %c0_i32 = arith.constant 0 : i32
    %c0_i32_0 = arith.constant 0 : i32
    %c0_i32_1 = arith.constant 0 : i32
    return %c0_i32, %c0_i32_0 : i32, i32
  }
  func.func @transform_2(%arg0: i32) -> (i32, i32) {
    %c0_i32 = arith.constant 0 : i32
    %c0_i32_0 = arith.constant 0 : i32
    %c0_i32_1 = arith.constant 0 : i32
    return %c0_i32, %c0_i32_0 : i32, i32
  }
  func.func @transform_3(%arg0: i32) -> (i32, i32) {
    %c0_i32 = arith.constant 0 : i32
    %c0_i32_0 = arith.constant 0 : i32
    return %c0_i32, %arg0 : i32, i32
  }
  func.func @transform_4(%arg0: i32) -> (i32, i32) {
    %c0_i32 = arith.constant 0 : i32
    %c0_i32_0 = arith.constant 0 : i32
    return %c0_i32, %arg0 : i32, i32
  }
  func.func @transform_5(%arg0: i32) -> (i32, i32) {
    %c0_i32 = arith.constant 0 : i32
    %c0_i32_0 = arith.constant 0 : i32
    return %c0_i32, %arg0 : i32, i32
  }
  func.func @transform_6(%arg0: i32) -> (i32, i32) {
    %c0_i32 = arith.constant 0 : i32
    %c0_i32_0 = arith.constant 0 : i32
    return %c0_i32, %arg0 : i32, i32
  }
  func.func @transform_7(%arg0: i32) -> (i32, i32) {
    %c0_i32 = arith.constant 0 : i32
    %c0_i32_0 = arith.constant 0 : i32
    return %arg0, %c0_i32 : i32, i32
  }
}

</mosaic_0001>

<llo_original>
// kernel: tpu_custom_call.1
$region0: #{tpu_custom_call.1}
  #allocation0 [shape = 'u32[]', space=smem, size = 0x4, offset = 0x4, fixed_abs, tag = 'smem constant byte address 0x4 - core index']
  #allocation1 [shape = 'u32[144,128]{1,0:T(1,128)}', space=vmem, size = 0x12000, scoped, tag = 'internal scratch']
  %s0 = inlined_call_operand.vmem [shape: f32[8,3], index: 0, kind: input, shape index: {}]
  %s1 = inlined_call_operand.vmem [shape: f32[8,1], index: 1, kind: input, shape index: {}]
  %s2 = inlined_call_operand.vmem [shape: f32[6,1], index: 2, kind: input, shape index: {}]
  %s3 = inlined_call_operand.vmem [shape: f32[6,256], index: 3, kind: input, shape index: {}]
  %s4 = inlined_call_operand.vmem [shape: f32[6,256], index: 4, kind: input, shape index: {}]
  %s5 = inlined_call_operand.vmem [shape: s32[2,256], index: 5, kind: input, shape index: {}]
  %s6 = inlined_call_operand.hbm [shape: f32[16,256], index: 6, kind: output, shape index: {0}]
  %s7 = inlined_call_operand.hbm [shape: f32[16,128], index: 7, kind: output, shape index: {1}]
  %8 = xla_tuple %s6, %s7
  %s9 = sld [smem:[#allocation0]]
  $region65: #{tpu_custom_call.1} parent=0
    _
  %s11 = ssub.s32 1, %s9
  %s12 = scalar_select 0, %s11, %s9
  $region1: #{tpu_custom_call.1} parent=0
    #allocation2 [shape = 'u8[16384]{0}', space=vmem, size = 0x4000, scoped, tag = 'output window, operand 0']
    #allocation3 [shape = 's32[2]{0}', space=sflag, size = 0x8, scoped, tag = 'scoped memory for tpu_custom_call.1']
    #allocation4 [shape = 'u8[8192]{0}', space=vmem, size = 0x2000, scoped, tag = 'output window, operand 1']
    #allocation5 [shape = 's32[2]{0}', space=sflag, size = 0x8, scoped, tag = 'scoped memory for tpu_custom_call.1']
    %13 = vsyncpa [#allocation3], 0
    %s14 = scalar_lea.sflag [#allocation3], 1
    %15 = vsyncpa %s14, 0
    %16 = vsyncpa [#allocation5], 0
    %s17 = scalar_lea.sflag [#allocation5], 1
    %18 = vsyncpa %s17, 0
    loop: start=0, step=1, limit=4
    $region2: #{tpu_custom_call.1} parent=1 // loop_pre_header
      _
    $region3: #{tpu_custom_call.1} parent=1 // loop_header
      %s20 = sphi 0, %s24
      %p21 = scmp.ge.s32.totalorder %s20, 4
      %s28 = sphi 0, %s28
      %s30 = sphi 0, %s28
      %s31 = sphi 0, %s30
      %s45 = sphi 0, %s31
      %s49 = sphi 0, %s49
      %s51 = sphi 0, %s49
      %s52 = sphi 0, %s51
      %s66 = sphi 0, %s52
      %s70 = sphi 0, %s70
      %s72 = sphi 0, %s70
      %s73 = sphi 0, %s72
      %s87 = sphi 0, %s73
      %s93 = sphi 0, %s95
      %s96 = sphi 0, %s93
      %s97 = sphi 0, %s96
      %s113 = sphi 0, %s97
      %s119 = sphi 0, %s121
      %s122 = sphi 0, %s119
      %s123 = sphi 0, %s122
      %s139 = sphi 0, %s123
      %s145 = sphi 0, %s147
      %s148 = sphi 0, %s145
      %s149 = sphi 0, %s148
      %s165 = sphi 0, %s149
      %s171 = sphi 0, %s173
      %s174 = sphi 0, %s171
      %s175 = sphi 0, %s174
      %s191 = sphi 0, %s175
      %s197 = sphi 0, %s199
      %s200 = sphi 0, %s197
      %s201 = sphi 0, %s200
      %s217 = sphi 0, %s201
    $region4: #{tpu_custom_call.1} parent=1 // loop_header_branch
      %23 = sbr.rel (%p21) target = $region8
    $region5: #{tpu_custom_call.1} parent=1 // loop_body
      %s25 = ssub.s32 %s20, 1
      %s26 = ssub.s32 %s20, 2
      %s27 = sadd.s32 %s20, 1
      %s29 = sadd.s32 %s28, 1
      %p32 = scmp.eq.s32.totalorder %s20, 1
      %p33 = scmp.ne.s32.totalorder %s28, %s30
      %p34 = scmp.eq.s32.totalorder %s20, 0
      %p35 = por %p33, %p34
      %p36 = scmp.ne.s32.totalorder %s28, %s30
      %p37 = scmp.eq.s32.totalorder %s25, 1
      %p38 = por %p36, %p37
      %p39 = scmp.ne.s32.totalorder %s30, %s31
      %p40 = scmp.eq.s32.totalorder %s25, 0
      %p41 = por %p39, %p40
      %p42 = scmp.ne.s32.totalorder %s30, %s31
      %p43 = scmp.eq.s32.totalorder %s26, 1
      %p44 = por %p42, %p43
      %p46 = scmp.ne.s32.totalorder %s31, %s45
      %p47 = scmp.eq.s32.totalorder %s26, 0
      %p48 = por %p46, %p47
      %s50 = sadd.s32 %s49, 1
      %p53 = scmp.eq.s32.totalorder %s20, 1
      %p54 = scmp.ne.s32.totalorder %s49, %s51
      %p55 = scmp.eq.s32.totalorder %s20, 0
      %p56 = por %p54, %p55
      %p57 = scmp.ne.s32.totalorder %s49, %s51
      %p58 = scmp.eq.s32.totalorder %s25, 1
      %p59 = por %p57, %p58
      %p60 = scmp.ne.s32.totalorder %s51, %s52
      %p61 = scmp.eq.s32.totalorder %s25, 0
      %p62 = por %p60, %p61
      %p63 = scmp.ne.s32.totalorder %s51, %s52
      %p64 = scmp.eq.s32.totalorder %s26, 1
      %p65 = por %p63, %p64
      %p67 = scmp.ne.s32.totalorder %s52, %s66
      %p68 = scmp.eq.s32.totalorder %s26, 0
      %p69 = por %p67, %p68
      %s71 = sadd.s32 %s70, 1
      %p74 = scmp.eq.s32.totalorder %s20, 1
      %p75 = scmp.ne.s32.totalorder %s70, %s72
      %p76 = scmp.eq.s32.totalorder %s20, 0
      %p77 = por %p75, %p76
      %p78 = scmp.ne.s32.totalorder %s70, %s72
      %p79 = scmp.eq.s32.totalorder %s25, 1
      %p80 = por %p78, %p79
      %p81 = scmp.ne.s32.totalorder %s72, %s73
      %p82 = scmp.eq.s32.totalorder %s25, 0
      %p83 = por %p81, %p82
      %p84 = scmp.ne.s32.totalorder %s72, %s73
      %p85 = scmp.eq.s32.totalorder %s26, 1
      %p86 = por %p84, %p85
      %p88 = scmp.ne.s32.totalorder %s73, %s87
      %p89 = scmp.eq.s32.totalorder %s26, 0
      %p90 = por %p88, %p89
      %s91 = ssub.s32 %s20, %s27
      %p92 = scmp.eq.s32.totalorder %s91, 0
      %s94 = sadd.s32 %s93, 1
      %s95 = scalar_select %p92, %s93, %s94
      %p98 = pneg %p92
      %p99 = scmp.eq.s32.totalorder %s20, 1
      %p100 = por %p98, %p99
      %p101 = scmp.ne.s32.totalorder %s93, %s96
      %p102 = scmp.eq.s32.totalorder %s20, 0
      %p103 = por %p101, %p102
      %p104 = scmp.ne.s32.totalorder %s93, %s96
      %p105 = scmp.eq.s32.totalorder %s25, 1
      %p106 = por %p104, %p105
      %p107 = scmp.ne.s32.totalorder %s96, %s97
      %p108 = scmp.eq.s32.totalorder %s25, 0
      %p109 = por %p107, %p108
      %p110 = scmp.ne.s32.totalorder %s96, %s97
      %p111 = scmp.eq.s32.totalorder %s26, 1
      %p112 = por %p110, %p111
      %p114 = scmp.ne.s32.totalorder %s97, %s113
      %p115 = scmp.eq.s32.totalorder %s26, 0
      %p116 = por %p114, %p115
      %s117 = ssub.s32 %s20, %s27
      %p118 = scmp.eq.s32.totalorder %s117, 0
      %s120 = sadd.s32 %s119, 1
      %s121 = scalar_select %p118, %s119, %s120
      %p124 = pneg %p118
      %p125 = scmp.eq.s32.totalorder %s20, 1
      %p126 = por %p124, %p125
      %p127 = scmp.ne.s32.totalorder %s119, %s122
      %p128 = scmp.eq.s32.totalorder %s20, 0
      %p129 = por %p127, %p128
      %p130 = scmp.ne.s32.totalorder %s119, %s122
      %p131 = scmp.eq.s32.totalorder %s25, 1
      %p132 = por %p130, %p131
      %p133 = scmp.ne.s32.totalorder %s122, %s123
      %p134 = scmp.eq.s32.totalorder %s25, 0
      %p135 = por %p133, %p134
      %p136 = scmp.ne.s32.totalorder %s122, %s123
      %p137 = scmp.eq.s32.totalorder %s26, 1
      %p138 = por %p136, %p137
      %p140 = scmp.ne.s32.totalorder %s123, %s139
      %p141 = scmp.eq.s32.totalorder %s26, 0
      %p142 = por %p140, %p141
      %s143 = ssub.s32 %s20, %s27
      %p144 = scmp.eq.s32.totalorder %s143, 0
      %s146 = sadd.s32 %s145, 1
      %s147 = scalar_select %p144, %s145, %s146
      %p150 = pneg %p144
      %p151 = scmp.eq.s32.totalorder %s20, 1
      %p152 = por %p150, %p151
      %p153 = scmp.ne.s32.totalorder %s145, %s148
      %p154 = scmp.eq.s32.totalorder %s20, 0
      %p155 = por %p153, %p154
      %p156 = scmp.ne.s32.totalorder %s145, %s148
      %p157 = scmp.eq.s32.totalorder %s25, 1
      %p158 = por %p156, %p157
      %p159 = scmp.ne.s32.totalorder %s148, %s149
      %p160 = scmp.eq.s32.totalorder %s25, 0
      %p161 = por %p159, %p160
      %p162 = scmp.ne.s32.totalorder %s148, %s149
      %p163 = scmp.eq.s32.totalorder %s26, 1
      %p164 = por %p162, %p163
      %p166 = scmp.ne.s32.totalorder %s149, %s165
      %p167 = scmp.eq.s32.totalorder %s26, 0
      %p168 = por %p166, %p167
      %s169 = ssub.s32 %s20, %s27
      %p170 = scmp.eq.s32.totalorder %s169, 0
      %s172 = sadd.s32 %s171, 1
      %s173 = scalar_select %p170, %s171, %s172
      %p176 = pneg %p170
      %p177 = scmp.eq.s32.totalorder %s20, 1
      %p178 = por %p176, %p177
      %p179 = scmp.ne.s32.totalorder %s171, %s174
      %p180 = scmp.eq.s32.totalorder %s20, 0
      %p181 = por %p179, %p180
      %p182 = scmp.ne.s32.totalorder %s171, %s174
      %p183 = scmp.eq.s32.totalorder %s25, 1
      %p184 = por %p182, %p183
      %p185 = scmp.ne.s32.totalorder %s174, %s175
      %p186 = scmp.eq.s32.totalorder %s25, 0
      %p187 = por %p185, %p186
      %p188 = scmp.ne.s32.totalorder %s174, %s175
      %p189 = scmp.eq.s32.totalorder %s26, 1
      %p190 = por %p188, %p189
      %p192 = scmp.ne.s32.totalorder %s175, %s191
      %p193 = scmp.eq.s32.totalorder %s26, 0
      %p194 = por %p192, %p193
      %s195 = ssub.s32 %s20, %s27
      %p196 = scmp.eq.s32.totalorder %s195, 0
      %s198 = sadd.s32 %s197, 1
      %s199 = scalar_select %p196, %s197, %s198
      %p202 = pneg %p196
      %p203 = scmp.eq.s32.totalorder %s20, 1
      %p204 = por %p202, %p203
      %p205 = scmp.ne.s32.totalorder %s197, %s200
      %p206 = scmp.eq.s32.totalorder %s20, 0
      %p207 = por %p205, %p206
      %p208 = scmp.ne.s32.totalorder %s197, %s200
      %p209 = scmp.eq.s32.totalorder %s25, 1
      %p210 = por %p208, %p209
      %p211 = scmp.ne.s32.totalorder %s200, %s201
      %p212 = scmp.eq.s32.totalorder %s25, 0
      %p213 = por %p211, %p212
      %p214 = scmp.ne.s32.totalorder %s200, %s201
      %p215 = scmp.eq.s32.totalorder %s26, 1
      %p216 = por %p214, %p215
      %p218 = scmp.ne.s32.totalorder %s201, %s217
      %p219 = scmp.eq.s32.totalorder %s26, 0
      %p220 = por %p218, %p219
      %p221 = scmp.le.s32.totalorder 1, %s20
      %p222 = scmp.lt.s32.totalorder %s20, 3
      %p223 = pnand %p221, %p222
      %p224 = pneg %p223
      // Predicated region
      $region9: #{tpu_custom_call.1} parent=5 // pred_check
        _
      $region10: #{tpu_custom_call.1} parent=5 // pred_check_branch
        %226 = sbr.rel (%p223) target = $region12
      $region11: #{tpu_custom_call.1} parent=5 // pred_region
        %s227 = ssub.s32 %s20, 1
        // Predicated region
        $region13: #{tpu_custom_call.1} parent=11 // pred_check
          %p228 = pneg %p41
        $region14: #{tpu_custom_call.1} parent=11 // pred_check_branch
          %230 = sbr.rel (%p228) target = $region16
        $region15: #{tpu_custom_call.1} parent=11 // pred_region
          _
        $region16: #{tpu_custom_call.1} parent=11 // pred_fallthru
          _
        // Predicated region
        $region17: #{tpu_custom_call.1} parent=11 // pred_check
          %p231 = pneg %p62
        $region18: #{tpu_custom_call.1} parent=11 // pred_check_branch
          %233 = sbr.rel (%p231) target = $region20
        $region19: #{tpu_custom_call.1} parent=11 // pred_region
          _
        $region20: #{tpu_custom_call.1} parent=11 // pred_fallthru
          _
        // Predicated region
        $region21: #{tpu_custom_call.1} parent=11 // pred_check
          %p234 = pneg %p83
        $region22: #{tpu_custom_call.1} parent=11 // pred_check_branch
          %236 = sbr.rel (%p234) target = $region24
        $region23: #{tpu_custom_call.1} parent=11 // pred_region
          _
        $region24: #{tpu_custom_call.1} parent=11 // pred_fallthru
          _
      $region12: #{tpu_custom_call.1} parent=5 // pred_fallthru
        _
      %p237 = scmp.lt.s32.totalorder %s20, 2
      // Predicated region
      $region25: #{tpu_custom_call.1} parent=5 // pred_check
        %p238 = pneg %p237
      $region26: #{tpu_custom_call.1} parent=5 // pred_check_branch
        %240 = sbr.rel (%p238) target = $region28
      $region27: #{tpu_custom_call.1} parent=5 // pred_region
        // Predicated region
        $region29: #{tpu_custom_call.1} parent=27 // pred_check
          %p241 = pneg %p103
        $region30: #{tpu_custom_call.1} parent=27 // pred_check_branch
          %243 = sbr.rel (%p241) target = $region32
        $region31: #{tpu_custom_call.1} parent=27 // pred_region
          %p244 = scmp.lt.s32.totalorder %s20, 1
          %s245 = scalar_select %p244, %s20, 1
          %s246 = smul.addr %s245, 8
          %s247 = scalar_lea.vmem %s3, %s246
        $region32: #{tpu_custom_call.1} parent=27 // pred_fallthru
          _
        // Predicated region
        $region33: #{tpu_custom_call.1} parent=27 // pred_check
          %p248 = pneg %p129
        $region34: #{tpu_custom_call.1} parent=27 // pred_check_branch
          %250 = sbr.rel (%p248) target = $region36
        $region35: #{tpu_custom_call.1} parent=27 // pred_region
          %p251 = scmp.lt.s32.totalorder %s20, 1
          %s252 = scalar_select %p251, %s20, 1
          %s253 = smul.addr %s252, 8
          %s254 = scalar_lea.vmem %s4, %s253
        $region36: #{tpu_custom_call.1} parent=27 // pred_fallthru
          _
        // Predicated region
        $region37: #{tpu_custom_call.1} parent=27 // pred_check
          %p255 = pneg %p155
        $region38: #{tpu_custom_call.1} parent=27 // pred_check_branch
          %257 = sbr.rel (%p255) target = $region40
        $region39: #{tpu_custom_call.1} parent=27 // pred_region
          %p258 = scmp.lt.s32.totalorder %s20, 1
          %s259 = scalar_select %p258, %s20, 1
          %s260 = smul.addr %s259, 2
          %s261 = scalar_lea.vmem %s5, %s260
        $region40: #{tpu_custom_call.1} parent=27 // pred_fallthru
          _
      $region28: #{tpu_custom_call.1} parent=5 // pred_fallthru
        _
      %p262 = scmp.le.s32.totalorder 1, %s20
      %p263 = scmp.lt.s32.totalorder %s20, 3
      %p264 = pnand %p262, %p263
      %p265 = pneg %p264
      // Predicated region
      $region41: #{tpu_custom_call.1} parent=5 // pred_check
        _
      $region42: #{tpu_custom_call.1} parent=5 // pred_check_branch
        %267 = sbr.rel (%p264) target = $region44
      $region43: #{tpu_custom_call.1} parent=5 // pred_region
        %s268 = ssub.s32 %s20, 1
        %p269 = pneg %p41
        %p270 = pneg %p38
        %p271 = pneg %p62
        %p272 = pneg %p59
        %p273 = pneg %p83
        %p274 = pneg %p80
        %p275 = scmp.lt.s32.totalorder %s25, 1
        %s276 = scalar_select %p275, %s25, 1
        %s277 = smul.addr %s276, 8
        %s278 = scalar_lea.vmem %s3, %s277
        %p279 = pneg %p109
        %p280 = pneg %p106
        %p281 = scmp.lt.s32.totalorder %s25, 1
        %s282 = scalar_select %p281, %s25, 1
        %s283 = smul.addr %s282, 8
        %s284 = scalar_lea.vmem %s4, %s283
        %p285 = pneg %p135
        %p286 = pneg %p132
        %p287 = scmp.lt.s32.totalorder %s25, 1
        %s288 = scalar_select %p287, %s25, 1
        %s289 = smul.addr %s288, 2
        %s290 = scalar_lea.vmem %s5, %s289
        %p291 = pneg %p161
        %p292 = pneg %p158
        %p293 = pneg %p187
        %p294 = pneg %p184
        %s295 = sand.u32 %s174, 1
        %s296 = scalar_lea.sflag [#allocation3], %s295
        %s297 = sand.u32 %s174, 1
        %s298 = smul.addr %s297, 16
        %s299 = scalar_lea.vmem [#allocation2], %s298
        %p300 = pneg %p213
        %p301 = pneg %p210
        %s302 = sand.u32 %s200, 1
        %s303 = scalar_lea.sflag [#allocation5], %s302
        %s304 = sand.u32 %s200, 1
        %s305 = smul.addr %s304, 8
        %s306 = scalar_lea.vmem [#allocation4], %s305
        %p307 = scmp.lt.s32.totalorder %s25, 1
        %s308 = scalar_select %p307, %s25, 1
        %s309 = smul.addr %s308, 8
        %s310 = scalar_lea.vmem %s3, %s309
        %p311 = scmp.lt.s32.totalorder %s25, 1
        %s312 = scalar_select %p311, %s25, 1
        %s313 = smul.addr %s312, 8
        %s314 = scalar_lea.vmem %s4, %s313
        %p315 = scmp.lt.s32.totalorder %s25, 1
        %s316 = scalar_select %p315, %s25, 1
        %s317 = smul.addr %s316, 2
        %s318 = scalar_lea.vmem %s5, %s317
        %v319 = vld [vmem:[%s310] sm:$0x3f]
        %v320 = vld [vmem:[%s314] sm:$0x3f]
        %v321 = vld [vmem:[%s2] sm:$0x3f]
        %323 = vset.pattern.permute.xlu0 0
        %324 = vperm.xlu0 %323, %v321
        %v325 = vpop.permute.xlu0 %324
        %v327 = vmul.f32 %v320, %v325
        %v328 = vadd.f32 %v319, %v327
        %v329 = vld [vmem:[%s0] sm:$0xff]
        %v330 = vld [vmem:[%s1] sm:$0xff]
        %v331 = vlaneseq
        %v332 = vshrl.u32 %v331, 7
        %334 = vset.pattern.permute.xlu0 0
        %335 = vperm.xlu0 %334, %v329
        %v336 = vpop.permute.xlu0 %335
        %v338 = vlaneseq
        %v339 = vshrl.u32 %v338, 7
        %v340 = vsub.s32 0, %v339
        %v341 = vrot.slane %v328, %v340
        %v342 = vmul.f32 %v336, %v341
        %344 = vset.pattern.permute.xlu0 0
        %345 = vperm.xlu0 %344, %v330
        %v346 = vpop.permute.xlu0 %345
        %v348 = vadd.f32 %v346, %v342
        %349 = vset.pattern.permute.xlu0 1
        %350 = vperm.xlu0 %349, %v329
        %v351 = vpop.permute.xlu0 %350
        %v353 = vlaneseq
        %v354 = vshrl.u32 %v353, 7
        %v355 = vsub.s32 1, %v354
        %v356 = vrot.slane %v328, %v355
        %v357 = vmul.f32 %v351, %v356
        %v358 = vadd.f32 %v348, %v357
        %359 = vset.pattern.permute.xlu0 2
        %360 = vperm.xlu0 %359, %v329
        %v361 = vpop.permute.xlu0 %360
        %v363 = vlaneseq
        %v364 = vshrl.u32 %v363, 7
        %v365 = vsub.s32 2, %v364
        %v366 = vrot.slane %v328, %v365
        %v367 = vmul.f32 %v361, %v366
        %v368 = vadd.f32 %v358, %v367
        %369 = vst [vmem:[%s299] sm:$0xff] %v368
        %v370 = vrot.slane %v368, 4
        %v371 = vmax.f32 %v368, %v370
        %v372 = vrot.slane %v371, 2
        %v373 = vmax.f32 %v371, %v372
        %v374 = vrot.slane %v373, 1
        %v375 = vmax.f32 %v373, %v374
        %v376 = vsub.f32 %v368, %v375
        %v377 = vmul.f32 %v376, 1.442695
        %v378 = vpow.pop %v377
        %v379 = vrot.slane %v378, 4
        %v380 = vadd.f32 %v378, %v379
        %v381 = vrot.slane %v380, 2
        %v382 = vadd.f32 %v380, %v381
        %v383 = vrot.slane %v382, 1
        %v384 = vadd.f32 %v382, %v383
        %v385 = vlog2.pop %v384
        %v386 = vmul.f32 %v385, 0.6931472
        %v387 = vadd.f32 %v375, %v386
        %v388 = vld [vmem:[%s318] sm:$0x1]
        %v389 = vlaneseq
        %v390 = vshrl.u32 %v389, 7
        %v391 = vsub.s32 0, %v390
        %v392 = vrot.slane %v388, %v391
        %vm393 = vcmp.eq.s32.totalorder %v332, %v392
        %v394 = vsel %vm393, %v368, 0.0
        %v395 = vrot.slane %v394, 4
        %v396 = vadd.f32 %v394, %v395
        %v397 = vrot.slane %v396, 2
        %v398 = vadd.f32 %v396, %v397
        %v399 = vrot.slane %v398, 1
        %v400 = vadd.f32 %v398, %v399
        %v401 = vsub.f32 %v387, %v400
        %vm402 = vcmask 1040384
        %v403 = vsel %vm402, %v401, 0.0
        %404 = vadd.xlane.f32.xlu0 %v403
        %v405 = vpop.xlane.xlu0 %404
        %v406 = vrot.slane %v405, 4
        %v407 = vadd.f32 %v405, %v406
        %v408 = vrot.slane %v407, 2
        %v409 = vadd.f32 %v407, %v408
        %v410 = vrot.slane %v409, 1
        %v411 = vadd.f32 %v409, %v410
        %s412 = vtos %v411
        %s413 = sadd.f32 %s412, 0.0
        %v414 = vlaneseq
        %v415 = vshrl.u32 %v414, 7
        %v416 = vsub.s32 3, %v415
        %v417 = vrot.slane %v328, %v416
        %v418 = vmul.f32 %v336, %v417
        %v419 = vadd.f32 %v346, %v418
        %v420 = vlaneseq
        %v421 = vshrl.u32 %v420, 7
        %v422 = vsub.s32 4, %v421
        %v423 = vrot.slane %v328, %v422
        %v424 = vmul.f32 %v351, %v423
        %v425 = vadd.f32 %v419, %v424
        %v426 = vlaneseq
        %v427 = vshrl.u32 %v426, 7
        %v428 = vsub.s32 5, %v427
        %v429 = vrot.slane %v328, %v428
        %v430 = vmul.f32 %v361, %v429
        %v431 = vadd.f32 %v425, %v430
        %432 = vst [vmem:[%s299 + $0x8] sm:$0xff] %v431
        %v433 = vrot.slane %v431, 4
        %v434 = vmax.f32 %v431, %v433
        %v435 = vrot.slane %v434, 2
        %v436 = vmax.f32 %v434, %v435
        %v437 = vrot.slane %v436, 1
        %v438 = vmax.f32 %v436, %v437
        %v439 = vsub.f32 %v431, %v438
        %v440 = vmul.f32 %v439, 1.442695
        %v441 = vpow.pop %v440
        %v442 = vrot.slane %v441, 4
        %v443 = vadd.f32 %v441, %v442
        %v444 = vrot.slane %v443, 2
        %v445 = vadd.f32 %v443, %v444
        %v446 = vrot.slane %v445, 1
        %v447 = vadd.f32 %v445, %v446
        %v448 = vlog2.pop %v447
        %v449 = vmul.f32 %v448, 0.6931472
        %v450 = vadd.f32 %v438, %v449
        %v451 = vld [vmem:[%s318 + $0x1] sm:$0x1]
        %v452 = vlaneseq
        %v453 = vshrl.u32 %v452, 7
        %v454 = vsub.s32 0, %v453
        %v455 = vrot.slane %v451, %v454
        %vm456 = vcmp.eq.s32.totalorder %v332, %v455
        %v457 = vsel %vm456, %v431, 0.0
        %v458 = vrot.slane %v457, 4
        %v459 = vadd.f32 %v457, %v458
        %v460 = vrot.slane %v459, 2
        %v461 = vadd.f32 %v459, %v460
        %v462 = vrot.slane %v461, 1
        %v463 = vadd.f32 %v461, %v462
        %v464 = vsub.f32 %v450, %v463
        %v465 = vsel %vm402, %v464, 0.0
        %466 = vadd.xlane.f32.xlu0 %v465
        %v467 = vpop.xlane.xlu0 %466
        %v468 = vrot.slane %v467, 4
        %v469 = vadd.f32 %v467, %v468
        %v470 = vrot.slane %v469, 2
        %v471 = vadd.f32 %v469, %v470
        %v472 = vrot.slane %v471, 1
        %v473 = vadd.f32 %v471, %v472
        %s474 = vtos %v473
        %s475 = sadd.f32 %s413, %s474
        %v476 = vlaneseq
        %v477 = vand.u32 %v476, 127
        %vm478 = vcmp.eq.s32.totalorder %v332, 0
        %vm479 = vcmp.eq.s32.totalorder %v477, 0
        %vm480 = vmand %vm478, %vm479
        %v481 = vstv %s475
        %v482 = vsel %vm480, %v481, 0.0
        %483 = vst [vmem:[%s306] sm:$0xff] %v482
        %s484 = sand.u32 %s174, 1
        %s485 = scalar_lea.sflag [#allocation3], %s484
        %s486 = sand.u32 %s174, 1
        %s487 = smul.addr %s486, 16
        %s488 = scalar_lea.vmem [#allocation2], %s487
        %s489 = sand.u32 %s200, 1
        %s490 = scalar_lea.sflag [#allocation5], %s489
        %s491 = sand.u32 %s200, 1
        %s492 = smul.addr %s491, 8
        %s493 = scalar_lea.vmem [#allocation4], %s492
        // Predicated region
        $region45: #{tpu_custom_call.1} parent=43 // pred_check
          %p494 = pneg %p184
        $region46: #{tpu_custom_call.1} parent=43 // pred_check_branch
          %496 = sbr.rel (%p494) target = $region48
        $region47: #{tpu_custom_call.1} parent=43 // pred_region
          %s498 = ssub.s32 256, 256
          %499 = vsyncadd %s485, %s498
          %s500 = smul.addr %s25, 128
          %s501 = scalar_lea.hbm %s6, %s500
          %s502 = sshll.u32 %s488, 4
          %s503 = int_to_ptr.vmem [resolvable:$true] %s502
          %508 = dma.vmem_to_hbm [thread:$0]  %s503, 256, %s501, %s485, 128, 256, 8
        $region48: #{tpu_custom_call.1} parent=43 // pred_fallthru
          _
        // Predicated region
        $region49: #{tpu_custom_call.1} parent=43 // pred_check
          %p509 = pneg %p210
        $region50: #{tpu_custom_call.1} parent=43 // pred_check_branch
          %511 = sbr.rel (%p509) target = $region52
        $region51: #{tpu_custom_call.1} parent=43 // pred_region
          %s513 = ssub.s32 128, 128
          %514 = vsyncadd %s490, %s513
          %s515 = smul.addr %s25, 128
          %s516 = scalar_lea.hbm %s7, %s515
          %s518 = sshll.u32 %s493, 4
          %s519 = int_to_ptr.vmem [resolvable:$true] %s518
          %521 = dma.vmem_to_hbm [thread:$0]  %s519, 128, %s516, %s490
        $region52: #{tpu_custom_call.1} parent=43 // pred_fallthru
          _
      $region44: #{tpu_custom_call.1} parent=5 // pred_fallthru
        _
      %p522 = scmp.le.s32.totalorder 2, %s20
      // Predicated region
      $region53: #{tpu_custom_call.1} parent=5 // pred_check
        %p523 = pneg %p522
      $region54: #{tpu_custom_call.1} parent=5 // pred_check_branch
        %525 = sbr.rel (%p523) target = $region56
      $region55: #{tpu_custom_call.1} parent=5 // pred_region
        %s526 = ssub.s32 %s20, 2
        // Predicated region
        $region57: #{tpu_custom_call.1} parent=55 // pred_check
          %p527 = pneg %p190
        $region58: #{tpu_custom_call.1} parent=55 // pred_check_branch
          %529 = sbr.rel (%p527) target = $region60
        $region59: #{tpu_custom_call.1} parent=55 // pred_region
          %s530 = sand.u32 %s175, 1
          %s531 = scalar_lea.sflag [#allocation3], %s530
          %s532 = sand.u32 %s175, 1
          %s533 = smul.addr %s532, 16
          %s534 = scalar_lea.vmem [#allocation2], %s533
          %535 = dma.done %s531, 256
        $region60: #{tpu_custom_call.1} parent=55 // pred_fallthru
          _
        // Predicated region
        $region61: #{tpu_custom_call.1} parent=55 // pred_check
          %p536 = pneg %p216
        $region62: #{tpu_custom_call.1} parent=55 // pred_check_branch
          %538 = sbr.rel (%p536) target = $region64
        $region63: #{tpu_custom_call.1} parent=55 // pred_region
          %s539 = sand.u32 %s201, 1
          %s540 = scalar_lea.sflag [#allocation5], %s539
          %s541 = sand.u32 %s201, 1
          %s542 = smul.addr %s541, 8
          %s543 = scalar_lea.vmem [#allocation4], %s542
          %544 = dma.done %s540, 128
        $region64: #{tpu_custom_call.1} parent=55 // pred_fallthru
          _
      $region56: #{tpu_custom_call.1} parent=5 // pred_fallthru
        _
    $region6: #{tpu_custom_call.1} parent=1 // loop_footer
      %s24 = sadd.s32 1, %s20
    $region7: #{tpu_custom_call.1} parent=1 // loop_footer_branch
      %19 = sbr.rel target = $region3
    $region8: #{tpu_custom_call.1} parent=1 // loop_exit
      _
    %545 = vsyncpa [#allocation3], 1
    %s546 = scalar_lea.sflag [#allocation3], 1
    %547 = vsyncpa %s546, 1
    %548 = vsyncpa [#allocation5], 1
    %s549 = scalar_lea.sflag [#allocation5], 1
    %550 = vsyncpa %s549, 1

</llo_original>
